<compile_context>
chip_gen: v5e
topology: v5e:2x2
jax: 0.10.0
libtpu: 0.0.40
codegen_flags: <defaults>
</compile_context>

<pallas_src>
import functools

import jax
import jax.numpy as jnp
from jax.experimental import pallas as pl
from jax.experimental.pallas import tpu as pltpu


def _stats_kernel(x_ref, rm_ref, rs_ref, new_rm_ref, new_rs_ref,
                  cnt_sc, sum_sc, sq_sc, *, momentum):
    i = pl.program_id(0)

    @pl.when(i == 0)
    def _init():
        cnt_sc[...] = jnp.zeros_like(cnt_sc)
        sum_sc[...] = jnp.zeros_like(sum_sc)
        sq_sc[...] = jnp.zeros_like(sq_sc)

    x = x_ref[...].astype(jnp.float32)          # [tn, F]
    mask = jnp.isnan(x)                         # single NaN scan
    xz = jnp.where(mask, 0.0, x)
    cnt_sc[...] += jnp.sum(jnp.where(mask, 0.0, 1.0), axis=0, keepdims=True)
    sum_sc[...] += jnp.sum(xz, axis=0, keepdims=True)
    sq_sc[...] += jnp.sum(xz * xz, axis=0, keepdims=True)

    @pl.when(i == pl.num_programs(0) - 1)
    def _finalize():
        cnt = cnt_sc[...]                       # [1, F]
        mean = sum_sc[...] / cnt                # 0/0 -> NaN (all-NaN feature)
        var = sq_sc[...] / cnt - mean * mean
        var = jnp.maximum(var, 0.0)             # clamp cancellation; NaN propagates
        std = jnp.sqrt(var)
        rm = rm_ref[...].astype(jnp.float32)
        rs = rs_ref[...].astype(jnp.float32)
        new_rm_ref[...] = momentum * mean + (1.0 - momentum) * rm
        new_rs_ref[...] = momentum * std + (1.0 - momentum) * rs


def _norm_kernel(x_ref, rm_ref, rs_ref, y_ref, *, eps):
    x = x_ref[...].astype(jnp.float32)          # [tn, F]
    inv = 1.0 / (rs_ref[...] + eps)             # exact per-feature reciprocal, [1, F]
    y_ref[...] = ((x - rm_ref[...]) * inv).astype(y_ref.dtype)


def nan_batch_norm_1d_naive(x, running_mean, running_std,
                            momentum=0.1, eps=1e-5, block_rows=512):
    """x: [bs, sl, fd]; running_mean/std: [1, 1, fd]."""
    bs, sl, fd = x.shape
    N = bs * sl
    x2d = x.reshape(N, fd)                      # keep native dtype; cast in-kernel
    rm2d = running_mean.reshape(1, fd).astype(jnp.float32)
    rs2d = running_std.reshape(1, fd).astype(jnp.float32)

    # Row tile: multiple of 8 (sublane). Pad N up with NaN rows; the NaN-aware
    # statistics ignore the padding and the padded output rows are sliced off.
    tn = min(block_rows, N)
    tn = max(8, ((tn + 7) // 8) * 8)
    n_pad = pl.cdiv(N, tn) * tn
    if n_pad != N:
        pad = jnp.full((n_pad - N, fd), jnp.nan, dtype=x2d.dtype)
        x2d_p = jnp.concatenate([x2d, pad], axis=0)
    else:
        x2d_p = x2d
    grid = (n_pad // tn,)

    # ---- Pass 1: streaming NaN-aware stats + running-stat update -----------
    new_rm2d, new_rs2d = pl.pallas_call(
        functools.partial(_stats_kernel, momentum=momentum),
        out_shape=(jax.ShapeDtypeStruct((1, fd), jnp.float32),
                   jax.ShapeDtypeStruct((1, fd), jnp.float32)),
        grid=grid,
        in_specs=[pl.BlockSpec((tn, fd), lambda i: (i, 0)),
                  pl.BlockSpec((1, fd), lambda i: (0, 0)),
                  pl.BlockSpec((1, fd), lambda i: (0, 0))],
        out_specs=(pl.BlockSpec((1, fd), lambda i: (0, 0)),
                   pl.BlockSpec((1, fd), lambda i: (0, 0))),
        scratch_shapes=[pltpu.VMEM((1, fd), jnp.float32)] * 3,
        compiler_params=pltpu.CompilerParams(
            dimension_semantics=("arbitrary",),
            vmem_limit_bytes=32 << 20),
    )(x2d_p, rm2d, rs2d)

    # ---- Pass 2: tiled normalize with the updated stats ---------------------
    y2d_p = pl.pallas_call(
        functools.partial(_norm_kernel, eps=eps),
        out_shape=jax.ShapeDtypeStruct((n_pad, fd), x.dtype),
        grid=grid,
        in_specs=[pl.BlockSpec((tn, fd), lambda i: (i, 0)),
                  pl.BlockSpec((1, fd), lambda i: (0, 0)),
                  pl.BlockSpec((1, fd), lambda i: (0, 0))],
        out_specs=pl.BlockSpec((tn, fd), lambda i: (i, 0)),
        compiler_params=pltpu.CompilerParams(
            dimension_semantics=("parallel",),
            vmem_limit_bytes=32 << 20),
    )(x2d_p, new_rm2d, new_rs2d)

    return (y2d_p[:N].reshape(bs, sl, fd),
            new_rm2d.reshape(1, 1, fd),
            new_rs2d.reshape(1, 1, fd))


def _reference(x, rm, rs, momentum=0.1, eps=1e-5):
    mask = jnp.isnan(x)
    cnt = jnp.sum(~mask, axis=(0, 1), keepdims=True).astype(jnp.float32)
    mean = jnp.nansum(x, axis=(0, 1), keepdims=True) / cnt
    dev_sq = (x - mean) ** 2
    sum_sq = jnp.nansum(dev_sq, axis=(0, 1), keepdims=True)
    std = jnp.sqrt(sum_sq / cnt)
    new_rm = momentum * mean + (1 - momentum) * rm
    new_rs = momentum * std + (1 - momentum) * rs
    return (x - new_rm) / (new_rs + eps), new_rm, new_rs


if __name__ == "__main__":
    bs, sl, fd = 2, 8, 32
    key = jax.random.PRNGKey(0)
    kx, kn = jax.random.split(key)

    x = jax.random.normal(kx, (bs, sl, fd), dtype=jnp.float32)
    # sprinkle deterministic NaNs (~10% of entries)
    nan_mask = jax.random.uniform(kn, (bs, sl, fd)) < 0.1
    x = jnp.where(nan_mask, jnp.nan, x)

    running_mean = jnp.zeros((1, 1, fd), dtype=jnp.float32)
    running_std = jnp.ones((1, 1, fd), dtype=jnp.float32)

    y, new_rm, new_rs = nan_batch_norm_1d_naive(x, running_mean, running_std)
    jax.block_until_ready((y, new_rm, new_rs))

    y_ref, rm_ref, rs_ref = _reference(x, running_mean, running_std)
    # NaN inputs stay NaN in the output (same positions) — compare finite parts.
    finite = ~jnp.isnan(y_ref)
    assert bool(jnp.array_equal(jnp.isnan(y), jnp.isnan(y_ref)))
    assert bool(jnp.allclose(jnp.where(finite, y, 0.0),
                             jnp.where(finite, y_ref, 0.0),
                             atol=1e-5, rtol=1e-5))
    assert bool(jnp.allclose(new_rm, rm_ref, atol=1e-5, rtol=1e-5))
    assert bool(jnp.allclose(new_rs, rs_ref, atol=1e-5, rtol=1e-5))

    print("KERNEL_OK")
</pallas_src>

<mosaic_0001>
module attributes {stable_mosaic.version = 11 : i64} {
  func.func @_stats_kernel(%arg0: i32, %arg1: memref<16x32xf32, #tpu.memory_space<vmem>>, %arg2: memref<1x32xf32, #tpu.memory_space<vmem>>, %arg3: memref<1x32xf32, #tpu.memory_space<vmem>>, %arg4: memref<1x32xf32, #tpu.memory_space<vmem>>, %arg5: memref<1x32xf32, #tpu.memory_space<vmem>>, %arg6: memref<1x32xf32, #tpu.memory_space<vmem>>, %arg7: memref<1x32xf32, #tpu.memory_space<vmem>>, %arg8: memref<1x32xf32, #tpu.memory_space<vmem>>) attributes {dimension_semantics = [#tpu.dimension_semantics<arbitrary>], iteration_bounds = array<i64: 1>, scalar_prefetch = 0 : i64, scratch_operands = 3 : i64, tpu.core_type = #tpu.core_type<tc>, window_params = [{transform_indices = @transform_0, window_bounds = array<i64: 16, 32>}, {pipeline_mode = #tpu.pipeline_mode<synchronous>, transform_indices = @transform_1, window_bounds = array<i64: 1, 32>}, {pipeline_mode = #tpu.pipeline_mode<synchronous>, transform_indices = @transform_2, window_bounds = array<i64: 1, 32>}, {pipeline_mode = #tpu.pipeline_mode<synchronous>, transform_indices = @transform_3, window_bounds = array<i64: 1, 32>}, {pipeline_mode = #tpu.pipeline_mode<synchronous>, transform_indices = @transform_4, window_bounds = array<i64: 1, 32>}]} {
    %c0_i32 = arith.constant 0 : i32
    %0 = arith.cmpi eq, %arg0, %c0_i32 : i32
    %1 = arith.extui %0 : i1 to i32
    %c0_i32_0 = arith.constant 0 : i32
    %2 = arith.cmpi ne, %1, %c0_i32_0 : i32
    scf.if %2 {
      %cst_21 = arith.constant 0.000000e+00 : f32
      %29 = vector.broadcast %cst_21 : f32 to vector<1x32xf32>
      %c0_22 = arith.constant 0 : index
      %c0_23 = arith.constant 0 : index
      %30 = vector.load %arg6[%c0_22, %c0_23] : memref<1x32xf32, #tpu.memory_space<vmem>>, vector<1x32xf32>
      tpu.vector_store %arg6[%c0_22, %c0_23], %29 {strides = array<i32>} : memref<1x32xf32, #tpu.memory_space<vmem>>, vector<1x32xf32>,
      %cst_24 = arith.constant 0.000000e+00 : f32
      %31 = vector.broadcast %cst_24 : f32 to vector<1x32xf32>
      %c0_25 = arith.constant 0 : index
      %c0_26 = arith.constant 0 : index
      %32 = vector.load %arg7[%c0_25, %c0_26] : memref<1x32xf32, #tpu.memory_space<vmem>>, vector<1x32xf32>
      tpu.vector_store %arg7[%c0_25, %c0_26], %31 {strides = array<i32>} : memref<1x32xf32, #tpu.memory_space<vmem>>, vector<1x32xf32>,
      %cst_27 = arith.constant 0.000000e+00 : f32
      %33 = vector.broadcast %cst_27 : f32 to vector<1x32xf32>
      %c0_28 = arith.constant 0 : index
      %c0_29 = arith.constant 0 : index
      %34 = vector.load %arg8[%c0_28, %c0_29] : memref<1x32xf32, #tpu.memory_space<vmem>>, vector<1x32xf32>
      tpu.vector_store %arg8[%c0_28, %c0_29], %33 {strides = array<i32>} : memref<1x32xf32, #tpu.memory_space<vmem>>, vector<1x32xf32>,
    } else {
    }
    %c0 = arith.constant 0 : index
    %c0_1 = arith.constant 0 : index
    %3 = vector.load %arg1[%c0, %c0_1] : memref<16x32xf32, #tpu.memory_space<vmem>>, vector<16x32xf32>
    %4 = arith.cmpf one, %3, %3 : vector<16x32xf32>
    %cst = arith.constant 0.000000e+00 : f32
    %5 = vector.broadcast %cst : f32 to vector<16x32xf32>
    %6 = arith.select %4, %5, %3 : vector<16x32xi1>, vector<16x32xf32>
    %c0_2 = arith.constant 0 : index
    %c0_3 = arith.constant 0 : index
    %7 = vector.load %arg6[%c0_2, %c0_3] : memref<1x32xf32, #tpu.memory_space<vmem>>, vector<1x32xf32>
    %cst_4 = arith.constant 0.000000e+00 : f32
    %cst_5 = arith.constant 1.000000e+00 : f32
    %8 = vector.broadcast %cst_4 : f32 to vector<16x32xf32>
    %9 = vector.broadcast %cst_5 : f32 to vector<16x32xf32>
    %10 = arith.select %4, %8, %9 : vector<16x32xi1>, vector<16x32xf32>
    %cst_6 = arith.constant dense<0.000000e+00> : vector<32xf32>
    %11 = vector.multi_reduction <add>, %10, %cst_6 [0] : vector<16x32xf32> to vector<32xf32>
    %12 = vector.shape_cast %11 : vector<32xf32> to vector<1x32xf32>
    %13 = arith.addf %7, %12 : vector<1x32xf32>
    %c0_7 = arith.constant 0 : index
    %c0_8 = arith.constant 0 : index
    %14 = vector.load %arg6[%c0_7, %c0_8] : memref<1x32xf32, #tpu.memory_space<vmem>>, vector<1x32xf32>
    tpu.vector_store %arg6[%c0_7, %c0_8], %13 {strides = array<i32>} : memref<1x32xf32, #tpu.memory_space<vmem>>, vector<1x32xf32>,
    %c0_9 = arith.constant 0 : index
    %c0_10 = arith.constant 0 : index
    %15 = vector.load %arg7[%c0_9, %c0_10] : memref<1x32xf32, #tpu.memory_space<vmem>>, vector<1x32xf32>
    %cst_11 = arith.constant dense<0.000000e+00> : vector<32xf32>
    %16 = vector.multi_reduction <add>, %6, %cst_11 [0] : vector<16x32xf32> to vector<32xf32>
    %17 = vector.shape_cast %16 : vector<32xf32> to vector<1x32xf32>
    %18 = arith.addf %15, %17 : vector<1x32xf32>
    %c0_12 = arith.constant 0 : index
    %c0_13 = arith.constant 0 : index
    %19 = vector.load %arg7[%c0_12, %c0_13] : memref<1x32xf32, #tpu.memory_space<vmem>>, vector<1x32xf32>
    tpu.vector_store %arg7[%c0_12, %c0_13], %18 {strides = array<i32>} : memref<1x32xf32, #tpu.memory_space<vmem>>, vector<1x32xf32>,
    %c0_14 = arith.constant 0 : index
    %c0_15 = arith.constant 0 : index
    %20 = vector.load %arg8[%c0_14, %c0_15] : memref<1x32xf32, #tpu.memory_space<vmem>>, vector<1x32xf32>
    %21 = arith.mulf %6, %6 : vector<16x32xf32>
    %cst_16 = arith.constant dense<0.000000e+00> : vector<32xf32>
    %22 = vector.multi_reduction <add>, %21, %cst_16 [0] : vector<16x32xf32> to vector<32xf32>
    %23 = vector.shape_cast %22 : vector<32xf32> to vector<1x32xf32>
    %24 = arith.addf %20, %23 : vector<1x32xf32>
    %c0_17 = arith.constant 0 : index
    %c0_18 = arith.constant 0 : index
    %25 = vector.load %arg8[%c0_17, %c0_18] : memref<1x32xf32, #tpu.memory_space<vmem>>, vector<1x32xf32>
    tpu.vector_store %arg8[%c0_17, %c0_18], %24 {strides = array<i32>} : memref<1x32xf32, #tpu.memory_space<vmem>>, vector<1x32xf32>,
    %c0_i32_19 = arith.constant 0 : i32
    %26 = arith.cmpi eq, %arg0, %c0_i32_19 : i32
    %27 = arith.extui %26 : i1 to i32
    %c0_i32_20 = arith.constant 0 : i32
    %28 = arith.cmpi ne, %27, %c0_i32_20 : i32
    scf.if %28 {
      %c0_21 = arith.constant 0 : index
      %c0_22 = arith.constant 0 : index
      %29 = vector.load %arg6[%c0_21, %c0_22] : memref<1x32xf32, #tpu.memory_space<vmem>>, vector<1x32xf32>
      %c0_23 = arith.constant 0 : index
      %c0_24 = arith.constant 0 : index
      %30 = vector.load %arg7[%c0_23, %c0_24] : memref<1x32xf32, #tpu.memory_space<vmem>>, vector<1x32xf32>
      %31 = arith.divf %30, %29 : vector<1x32xf32>
      %c0_25 = arith.constant 0 : index
      %c0_26 = arith.constant 0 : index
      %32 = vector.load %arg8[%c0_25, %c0_26] : memref<1x32xf32, #tpu.memory_space<vmem>>, vector<1x32xf32>
      %33 = arith.divf %32, %29 : vector<1x32xf32>
      %34 = arith.mulf %31, %31 : vector<1x32xf32>
      %35 = arith.subf %33, %34 : vector<1x32xf32>
      %cst_27 = arith.constant 0.000000e+00 : f32
      %36 = vector.broadcast %cst_27 : f32 to vector<1x32xf32>
      %37 = arith.maximumf %35, %36 : vector<1x32xf32>
      %38 = math.sqrt %37 : vector<1x32xf32>
      %c0_28 = arith.constant 0 : index
      %c0_29 = arith.constant 0 : index
      %39 = vector.load %arg2[%c0_28, %c0_29] : memref<1x32xf32, #tpu.memory_space<vmem>>, vector<1x32xf32>
      %c0_30 = arith.constant 0 : index
      %c0_31 = arith.constant 0 : index
      %40 = vector.load %arg3[%c0_30, %c0_31] : memref<1x32xf32, #tpu.memory_space<vmem>>, vector<1x32xf32>
      %cst_32 = arith.constant 1.000000e-01 : f32
      %41 = vector.broadcast %cst_32 : f32 to vector<1x32xf32>
      %42 = arith.mulf %41, %31 : vector<1x32xf32>
      %cst_33 = arith.constant 0.899999976 : f32
      %43 = vector.broadcast %cst_33 : f32 to vector<1x32xf32>
      %44 = arith.mulf %43, %39 : vector<1x32xf32>
      %45 = arith.addf %42, %44 : vector<1x32xf32>
      %c0_34 = arith.constant 0 : index
      %c0_35 = arith.constant 0 : index
      %46 = vector.load %arg4[%c0_34, %c0_35] : memref<1x32xf32, #tpu.memory_space<vmem>>, vector<1x32xf32>
      tpu.vector_store %arg4[%c0_34, %c0_35], %45 {strides = array<i32>} : memref<1x32xf32, #tpu.memory_space<vmem>>, vector<1x32xf32>,
      %cst_36 = arith.constant 1.000000e-01 : f32
      %47 = vector.broadcast %cst_36 : f32 to vector<1x32xf32>
      %48 = arith.mulf %47, %38 : vector<1x32xf32>
      %cst_37 = arith.constant 0.899999976 : f32
      %49 = vector.broadcast %cst_37 : f32 to vector<1x32xf32>
      %50 = arith.mulf %49, %40 : vector<1x32xf32>
      %51 = arith.addf %48, %50 : vector<1x32xf32>
      %c0_38 = arith.constant 0 : index
      %c0_39 = arith.constant 0 : index
      %52 = vector.load %arg5[%c0_38, %c0_39] : memref<1x32xf32, #tpu.memory_space<vmem>>, vector<1x32xf32>
      tpu.vector_store %arg5[%c0_38, %c0_39], %51 {strides = array<i32>} : memref<1x32xf32, #tpu.memory_space<vmem>>, vector<1x32xf32>,
    } else {
    }
    return
  }
  func.func @transform_0(%arg0: i32) -> (i32, i32) {
    %c0_i32 = arith.constant 0 : i32
    %c0_i32_0 = arith.constant 0 : i32
    return %arg0, %c0_i32 : i32, i32
  }
  func.func @transform_1(%arg0: i32) -> (i32, i32) {
    %c0_i32 = arith.constant 0 : i32
    %c0_i32_0 = arith.constant 0 : i32
    %c0_i32_1 = arith.constant 0 : i32
    return %c0_i32, %c0_i32_0 : i32, i32
  }
  func.func @transform_2(%arg0: i32) -> (i32, i32) {
    %c0_i32 = arith.constant 0 : i32
    %c0_i32_0 = arith.constant 0 : i32
    %c0_i32_1 = arith.constant 0 : i32
    return %c0_i32, %c0_i32_0 : i32, i32
  }
  func.func @transform_3(%arg0: i32) -> (i32, i32) {
    %c0_i32 = arith.constant 0 : i32
    %c0_i32_0 = arith.constant 0 : i32
    %c0_i32_1 = arith.constant 0 : i32
    return %c0_i32, %c0_i32_0 : i32, i32
  }
  func.func @transform_4(%arg0: i32) -> (i32, i32) {
    %c0_i32 = arith.constant 0 : i32
    %c0_i32_0 = arith.constant 0 : i32
    %c0_i32_1 = arith.constant 0 : i32
    return %c0_i32, %c0_i32_0 : i32, i32
  }
}

</mosaic_0001>

<llo_original>
// kernel: tpu_custom_call.1
$region0: #{tpu_custom_call.1}
  #allocation0 [shape = 'u32[]', space=smem, size = 0x4, offset = 0x4, fixed_abs, tag = 'smem constant byte address 0x4 - core index']
  #allocation1 [shape = 'u32[72,128]{1,0:T(1,128)}', space=vmem, size = 0x9000, scoped, tag = 'internal scratch']
  #allocation2 [shape = 'f32[1,32]{1,0:T(1,128)}', space=vmem, size = 0x200, scoped, tag = 'scratch operand']
  #allocation3 [shape = 'f32[1,32]{1,0:T(1,128)}', space=vmem, size = 0x200, scoped, tag = 'scratch operand']
  #allocation4 [shape = 'f32[1,32]{1,0:T(1,128)}', space=vmem, size = 0x200, scoped, tag = 'scratch operand']
  %s0 = inlined_call_operand.hbm [shape: f32[16,32], index: 0, kind: input, shape index: {}]
  %s1 = inlined_call_operand.hbm [shape: f32[1,32], index: 1, kind: input, shape index: {}]
  %s2 = inlined_call_operand.vmem [shape: f32[1,32], index: 2, kind: input, shape index: {}]
  %s3 = inlined_call_operand.hbm [shape: f32[1,32], index: 3, kind: output, shape index: {0}]
  %s4 = inlined_call_operand.hbm [shape: f32[1,32], index: 4, kind: output, shape index: {1}]
  %5 = xla_tuple %s3, %s4
  %s6 = sld [smem:[#allocation0]]
  $region46: #{tpu_custom_call.1} parent=0
    _
  %s8 = ssub.s32 1, %s6
  %s9 = scalar_select 0, %s8, %s6
  $region1: #{tpu_custom_call.1} parent=0
    #allocation5 [shape = 'u8[8192]{0}', space=vmem, size = 0x2000, scoped, tag = 'input window, operand 0, single buffered']
    #allocation6 [shape = 's32[1]{0}', space=sflag, size = 0x4, scoped, tag = 'scoped memory for tpu_custom_call.1']
    #allocation7 [shape = 's32[1]{0}', space=sflag, size = 0x4, scoped, tag = 'scoped memory for tpu_custom_call.1']
    #allocation8 [shape = 'u8[512]{0}', space=vmem, size = 0x400, scoped, tag = 'input window, operand 1, single buffered']
    #allocation9 [shape = 's32[1]{0}', space=sflag, size = 0x4, scoped, tag = 'scoped memory for tpu_custom_call.1']
    #allocation10 [shape = 'u8[512]{0}', space=vmem, size = 0x400, scoped, tag = 'output window, operand 0, single buffered']
    #allocation11 [shape = 'u8[512]{0}', space=vmem, size = 0x400, scoped, tag = 'output window, operand 1, single buffered']
    #allocation12 [shape = 's32[1]{0}', space=sflag, size = 0x4, scoped, tag = 'scoped memory for tpu_custom_call.1']
    %10 = vsyncpa [#allocation6], 0
    %11 = vsyncpa [#allocation9], 0
    %12 = vsyncpa [#allocation7], 0
    %13 = vsyncpa [#allocation12], 0
    // Predicated region
    $region2: #{tpu_custom_call.1} parent=1 // pred_check
      _
    $region3: #{tpu_custom_call.1} parent=1 // pred_check_branch
      %15 = sbr.rel (0) target = $region5
    $region4: #{tpu_custom_call.1} parent=1 // pred_region
      %17 = vsyncadd [#allocation6], 0
      %s18 = sshll.u32 %s0, 4
      %s19 = int_to_ptr.hbm [resolvable:$true] %s18
      %s20 = sshll.u32 [#allocation5], 4
      %s21 = int_to_ptr.vmem [resolvable:$true] %s20
      %26 = dma.hbm_to_vmem [thread:$0]  %s19, 256, %s21, [#allocation6], 128, 128, 8
    $region5: #{tpu_custom_call.1} parent=1 // pred_fallthru
      _
    // Predicated region
    $region6: #{tpu_custom_call.1} parent=1 // pred_check
      _
    $region7: #{tpu_custom_call.1} parent=1 // pred_check_branch
      %28 = sbr.rel (0) target = $region9
    $region8: #{tpu_custom_call.1} parent=1 // pred_region
      %30 = vsyncadd [#allocation9], 0
      %s32 = sshll.u32 %s1, 4
      %s33 = int_to_ptr.hbm [resolvable:$true] %s32
      %s34 = sshll.u32 [#allocation8], 4
      %s35 = int_to_ptr.vmem [resolvable:$true] %s34
      %37 = dma.hbm_to_vmem [thread:$0]  %s33, 16, %s35, [#allocation9]
    $region9: #{tpu_custom_call.1} parent=1 // pred_fallthru
      _
    // Predicated region
    $region10: #{tpu_custom_call.1} parent=1 // pred_check
      _
    $region11: #{tpu_custom_call.1} parent=1 // pred_check_branch
      %39 = sbr.rel (0) target = $region13
    $region12: #{tpu_custom_call.1} parent=1 // pred_region
      _
    $region13: #{tpu_custom_call.1} parent=1 // pred_fallthru
      _
    // Predicated region
    $region14: #{tpu_custom_call.1} parent=1 // pred_check
      _
    $region15: #{tpu_custom_call.1} parent=1 // pred_check_branch
      %41 = sbr.rel (0) target = $region17
    $region16: #{tpu_custom_call.1} parent=1 // pred_region
      %43 = dma.done [#allocation6], 256
    $region17: #{tpu_custom_call.1} parent=1 // pred_fallthru
      _
    // Predicated region
    $region18: #{tpu_custom_call.1} parent=1 // pred_check
      _
    $region19: #{tpu_custom_call.1} parent=1 // pred_check_branch
      %45 = sbr.rel (0) target = $region21
    $region20: #{tpu_custom_call.1} parent=1 // pred_region
      %47 = dma.done [#allocation9], 16
    $region21: #{tpu_custom_call.1} parent=1 // pred_fallthru
      _
    %p48 = scmp.eq.s32.totalorder 0, 0
    // Predicated region
    $region22: #{tpu_custom_call.1} parent=1 // pred_check
      %p49 = pneg %p48
    $region23: #{tpu_custom_call.1} parent=1 // pred_check_branch
      %51 = sbr.rel (%p49) target = $region25
    $region24: #{tpu_custom_call.1} parent=1 // pred_region
      %vm52 = vcmask 253952
      %53 = vst.msk [vmem:[#allocation2] sm:$0x1] %vm52, 0.0
      %54 = vst.msk [vmem:[#allocation3] sm:$0x1] %vm52, 0.0
      %55 = vst.msk [vmem:[#allocation4] sm:$0x1] %vm52, 0.0
    $region25: #{tpu_custom_call.1} parent=1 // pred_fallthru
      _
    %v56 = vld [vmem:[#allocation5] sm:$0xff]
    %v57 = vld [vmem:[#allocation5 + $0x8] sm:$0xff]
    %vm58 = vcmp.ne.f32.partialorder %v56, %v56
    %vm59 = vcmp.ne.f32.partialorder %v57, %v57
    %v60 = vsel %vm58, 0.0, %v56
    %v61 = vsel %vm59, 0.0, %v57
    %v62 = vld [vmem:[#allocation2] sm:$0x1]
    %v63 = vsel %vm58, 0.0, 1.0
    %v64 = vsel %vm59, 0.0, 1.0
    %vm65 = vcmask 261120
    %v66 = vsel %vm65, %v63, 0.0
    %v67 = vsel %vm65, %v64, 0.0
    %v68 = vadd.f32 %v66, %v67
    %v69 = vrot.slane %v68, 4
    %v70 = vadd.f32 %v68, %v69
    %v71 = vrot.slane %v70, 2
    %v72 = vadd.f32 %v70, %v71
    %v73 = vrot.slane %v72, 1
    %v74 = vadd.f32 %v72, %v73
    %v75 = vadd.f32 %v62, %v74
    %vm76 = vcmask 253952
    %77 = vst.msk [vmem:[#allocation2] sm:$0x1] %vm76, %v75
    %v78 = vld [vmem:[#allocation3] sm:$0x1]
    %v79 = vsel %vm65, %v60, 0.0
    %v80 = vsel %vm65, %v61, 0.0
    %v81 = vadd.f32 %v79, %v80
    %v82 = vrot.slane %v81, 4
    %v83 = vadd.f32 %v81, %v82
    %v84 = vrot.slane %v83, 2
    %v85 = vadd.f32 %v83, %v84
    %v86 = vrot.slane %v85, 1
    %v87 = vadd.f32 %v85, %v86
    %v88 = vadd.f32 %v78, %v87
    %89 = vst.msk [vmem:[#allocation3] sm:$0x1] %vm76, %v88
    %v90 = vld [vmem:[#allocation4] sm:$0x1]
    %v91 = vmul.f32 %v60, %v60
    %v92 = vmul.f32 %v61, %v61
    %v93 = vsel %vm65, %v91, 0.0
    %v94 = vsel %vm65, %v92, 0.0
    %v95 = vadd.f32 %v93, %v94
    %v96 = vrot.slane %v95, 4
    %v97 = vadd.f32 %v95, %v96
    %v98 = vrot.slane %v97, 2
    %v99 = vadd.f32 %v97, %v98
    %v100 = vrot.slane %v99, 1
    %v101 = vadd.f32 %v99, %v100
    %v102 = vadd.f32 %v90, %v101
    %103 = vst.msk [vmem:[#allocation4] sm:$0x1] %vm76, %v102
    // Predicated region
    $region26: #{tpu_custom_call.1} parent=1 // pred_check
      %p104 = pneg %p48
    $region27: #{tpu_custom_call.1} parent=1 // pred_check_branch
      %106 = sbr.rel (%p104) target = $region29
    $region28: #{tpu_custom_call.1} parent=1 // pred_region
      %v107 = vld [vmem:[#allocation2] sm:$0x1]
      %v108 = vld [vmem:[#allocation3] sm:$0x1]
      %v109 = vrcp.pop %v107
      %v110 = vmul.f32 %v107, %v109
      %v111 = vsub.f32 1.0, %v110
      %v112 = vmul.f32 %v109, %v111
      %v113 = vadd.f32 %v109, %v112
      %vm114 = vweird.f32 %v107
      %vm115 = vweird.f32 %v109
      %vm116 = vmor %vm114, %vm115
      %v117 = vsel %vm116, %v109, %v113
      %v118 = vand.u32 2147483647, %v107
      %vm119 = vcmp.eq.f32.partialorder %v118, 8.507059e+37
      %v120 = vand.u32 %v107, 2147483648
      %v121 = vor.u32 1.1754944e-38, %v120
      %v122 = vsel %vm119, %v121, %v117
      %v123 = vmul.f32 %v108, %v122
      %v124 = vld [vmem:[#allocation4] sm:$0x1]
      %v125 = vmul.f32 %v124, %v122
      %v126 = vmul.f32 %v123, %v123
      %v127 = vsub.f32 %v125, %v126
      %v128 = vmax.f32 %v127, 0.0
      %v129 = vrsqrt.pop %v128
      %v130 = vmul.f32 %v129, %v128
      %v131 = vmul.f32 %v130, %v129
      %v132 = vmul.f32 0.5, %v131
      %v133 = vsub.f32 1.5, %v132
      %v134 = vmul.f32 %v129, %v133
      %v135 = vmul.f32 %v128, %v134
      %vm136 = vcmp.eq.f32.partialorder %v128, inf
      %v137 = vsel %vm136, %v128, %v135
      %vm138 = vcmp.eq.f32.partialorder %v128, 0.0
      %v139 = vand.u32 %v128, 2147483648
      %v140 = vsel %vm138, %v139, %v137
      %v141 = vld [vmem:[#allocation8] sm:$0x1]
      %v142 = vld [vmem:[%s2] sm:$0x1]
      %v143 = vmul.f32 %v123, 0.1
      %v144 = vmul.f32 %v141, 0.9
      %v145 = vadd.f32 %v143, %v144
      %146 = vst.msk [vmem:[#allocation10] sm:$0x1] %vm76, %v145
      %v147 = vmul.f32 %v140, 0.1
      %v148 = vmul.f32 %v142, 0.9
      %v149 = vadd.f32 %v147, %v148
      %150 = vst.msk [vmem:[#allocation11] sm:$0x1] %vm76, %v149
    $region29: #{tpu_custom_call.1} parent=1 // pred_fallthru
      _
    // Predicated region
    $region30: #{tpu_custom_call.1} parent=1 // pred_check
      _
    $region31: #{tpu_custom_call.1} parent=1 // pred_check_branch
      %152 = sbr.rel (0) target = $region33
    $region32: #{tpu_custom_call.1} parent=1 // pred_region
      %154 = vsyncadd [#allocation7], 0
      %s156 = sshll.u32 [#allocation10], 4
      %s157 = int_to_ptr.vmem [resolvable:$true] %s156
      %s158 = sshll.u32 %s3, 4
      %s159 = int_to_ptr.hbm [resolvable:$true] %s158
      %161 = dma.vmem_to_hbm [thread:$0]  %s157, 16, %s159, [#allocation7]
    $region33: #{tpu_custom_call.1} parent=1 // pred_fallthru
      _
    // Predicated region
    $region34: #{tpu_custom_call.1} parent=1 // pred_check
      _
    $region35: #{tpu_custom_call.1} parent=1 // pred_check_branch
      %163 = sbr.rel (0) target = $region37
    $region36: #{tpu_custom_call.1} parent=1 // pred_region
      %165 = vsyncadd [#allocation12], 0
      %s167 = sshll.u32 [#allocation11], 4
      %s168 = int_to_ptr.vmem [resolvable:$true] %s167
      %s169 = sshll.u32 %s4, 4
      %s170 = int_to_ptr.hbm [resolvable:$true] %s169
      %172 = dma.vmem_to_hbm [thread:$0]  %s168, 16, %s170, [#allocation12]
    $region37: #{tpu_custom_call.1} parent=1 // pred_fallthru
      _
    // Predicated region
    $region38: #{tpu_custom_call.1} parent=1 // pred_check
      _
    $region39: #{tpu_custom_call.1} parent=1 // pred_check_branch
      %174 = sbr.rel (0) target = $region41
    $region40: #{tpu_custom_call.1} parent=1 // pred_region
      %176 = dma.done [#allocation7], 16
    $region41: #{tpu_custom_call.1} parent=1 // pred_fallthru
      _
    // Predicated region
    $region42: #{tpu_custom_call.1} parent=1 // pred_check
      _
    $region43: #{tpu_custom_call.1} parent=1 // pred_check_branch
      %178 = sbr.rel (0) target = $region45
    $region44: #{tpu_custom_call.1} parent=1 // pred_region
      %180 = dma.done [#allocation12], 16
    $region45: #{tpu_custom_call.1} parent=1 // pred_fallthru
      _
    %181 = vsyncpa [#allocation6], 1
    %182 = vsyncpa [#allocation9], 1
    %183 = vsyncpa [#allocation7], 1
    %184 = vsyncpa [#allocation12], 1

</llo_original>
